<compile_context>
chip_gen: v6e
topology: v6e:2x2x1
jax: 0.10.0
libtpu: 0.0.40
codegen_flags: <defaults>
</compile_context>

<pallas_src>
import jax
import jax.numpy as jnp
from jax.experimental import pallas as pl
from jax.experimental.pallas import tpu as pltpu

LANE = 128           # TPU lane width; padded out_features for fc2/fc3/fc4
NEG = -1e30          # effectively -inf mask for padded class lanes
IN_DIM = 28 * 28


def _round_up(x, m):
    return (x + m - 1) // m * m


def mlp_kernel(x_ref, w1_ref, b1_ref, w2_ref, b2_ref, w3_ref, b3_ref,
               w4_ref, b4_ref, o_ref):
    # fc1 + relu  (bf16 operands, f32 accumulation, f32 elementwise)
    h = jnp.dot(x_ref[...], w1_ref[...], preferred_element_type=jnp.float32)
    h = jnp.maximum(h + b1_ref[...], 0.0)
    # fc2 + relu  (out padded to 128 lanes; padded lanes are exactly 0)
    h = jnp.dot(h.astype(jnp.bfloat16), w2_ref[...],
                preferred_element_type=jnp.float32)
    h = jnp.maximum(h + b2_ref[...], 0.0)
    # fc3 + relu
    h = jnp.dot(h.astype(jnp.bfloat16), w3_ref[...],
                preferred_element_type=jnp.float32)
    h = jnp.maximum(h + b3_ref[...], 0.0)
    # fc4: padded class lanes carry bias NEG (~ -inf), so they vanish in the softmax
    logits = jnp.dot(h.astype(jnp.bfloat16), w4_ref[...],
                     preferred_element_type=jnp.float32)
    logits = logits + b4_ref[...]
    # fused, numerically-stable log_softmax over the (padded) class axis
    m = jnp.max(logits, axis=-1, keepdims=True)
    shifted = logits - m
    lse = jnp.log(jnp.sum(jnp.exp(shifted), axis=-1, keepdims=True))
    o_ref[...] = (shifted - lse).astype(o_ref.dtype)


def pack_params(params):
    """Pad narrow layers to 128 lanes and cast matmul operands to bf16."""
    def pad_w(w, rows, cols):
        out = jnp.zeros((rows, cols), jnp.float32)
        out = out.at[:w.shape[0], :w.shape[1]].set(w)
        return out.astype(jnp.bfloat16)

    def pad_b(b, cols, fill=0.0):
        out = jnp.full((1, cols), fill, jnp.float32)
        return out.at[:, :b.shape[1]].set(b)

    return dict(
        w1=params["w1"].astype(jnp.bfloat16),        # (784, 128)
        b1=params["b1"].astype(jnp.float32),         # (1, 128)
        w2=pad_w(params["w2"], 128, LANE),           # (128, 128), cols 64: zero
        b2=pad_b(params["b2"], LANE),                # padded lanes -> relu(0) = 0
        w3=pad_w(params["w3"], LANE, LANE),          # (128, 128)
        b3=pad_b(params["b3"], LANE),
        w4=pad_w(params["w4"], LANE, LANE),          # (128, 128)
        b4=pad_b(params["b4"], LANE, fill=NEG),      # padded classes masked to ~-inf
    )


def mlp_forward(x, packed, *, tb=1024):
    """x: (B, 784) float32. packed: output of pack_params. Returns (B, 10) f32 log-probs."""
    B, D = x.shape
    assert D == IN_DIM
    # batch tile: large (512-2048) for real batches, small multiple of 16 for tiny ones
    TB = min(tb, max(16, _round_up(B, 16)))
    Bp = _round_up(B, TB)
    if Bp != B:
        x = jnp.pad(x, ((0, Bp - B), (0, 0)))
    x = x.astype(jnp.bfloat16)

    grid = (Bp // TB,)

    def resident(shape):
        # weights/biases: same block every grid step -> stay in VMEM, no re-DMA
        return pl.BlockSpec(shape, lambda i: (0, 0))

    padded_flops_per_row = 2 * (IN_DIM * 128 + 3 * LANE * LANE)
    cost = pl.CostEstimate(
        flops=Bp * padded_flops_per_row,
        transcendentals=Bp * (LANE + 1),
        bytes_accessed=(Bp * IN_DIM * 2 + Bp * LANE * 4
                        + (IN_DIM * 128 + 3 * LANE * LANE) * 2 + 4 * LANE * 4),
    )

    out = pl.pallas_call(
        mlp_kernel,
        out_shape=jax.ShapeDtypeStruct((Bp, LANE), jnp.float32),
        grid=grid,
        in_specs=[
            pl.BlockSpec((TB, IN_DIM), lambda i: (i, 0)),   # x: streamed batch tiles
            resident((IN_DIM, 128)), resident((1, LANE)),   # fc1
            resident((128, LANE)), resident((1, LANE)),     # fc2
            resident((LANE, LANE)), resident((1, LANE)),    # fc3
            resident((LANE, LANE)), resident((1, LANE)),    # fc4
        ],
        out_specs=pl.BlockSpec((TB, LANE), lambda i: (i, 0)),
        compiler_params=pltpu.CompilerParams(
            dimension_semantics=("parallel",),   # megacore-shard batch tiles on v7x
            vmem_limit_bytes=48 << 20),          # v7x-safe (64 MiB physical per TC)
        cost_estimate=cost,
    )(x, packed["w1"], packed["b1"], packed["w2"], packed["b2"],
      packed["w3"], packed["b3"], packed["w4"], packed["b4"])

    return out[:B, :10]


def init_params(key):
    """Deterministic init mirroring nn.Linear default (uniform +/- 1/sqrt(fan_in))."""
    dims = [(IN_DIM, 128), (128, 64), (64, 32), (32, 10)]
    params = {}
    keys = jax.random.split(key, 2 * len(dims))
    for i, (fan_in, fan_out) in enumerate(dims):
        bound = 1.0 / (fan_in ** 0.5)
        params[f"w{i + 1}"] = jax.random.uniform(
            keys[2 * i], (fan_in, fan_out), minval=-bound, maxval=bound,
            dtype=jnp.float32)
        params[f"b{i + 1}"] = jax.random.uniform(
            keys[2 * i + 1], (1, fan_out), minval=-bound, maxval=bound,
            dtype=jnp.float32)
    return params


def mlp_reference(x, params):
    h = jnp.maximum(x @ params["w1"] + params["b1"], 0.0)
    h = jnp.maximum(h @ params["w2"] + params["b2"], 0.0)
    h = jnp.maximum(h @ params["w3"] + params["b3"], 0.0)
    logits = h @ params["w4"] + params["b4"]
    return jax.nn.log_softmax(logits, axis=-1)


if __name__ == "__main__":
    key = jax.random.PRNGKey(0)
    pkey, xkey = jax.random.split(key)
    params = init_params(pkey)
    packed = pack_params(params)
    x = jax.random.normal(xkey, (8, IN_DIM), dtype=jnp.float32)

    out = jax.block_until_ready(mlp_forward(x, packed))

    assert out.shape == (8, 10)
    # log_softmax rows must exp-sum to ~1 (exact w.r.t. the kernel's own logits)
    row_sums = jnp.sum(jnp.exp(out), axis=1)
    assert bool(jnp.all(jnp.abs(row_sums - 1.0) < 1e-4))
    # compare against the f32 pure-JAX reference (loose tol for bf16 matmul operands)
    ref = mlp_reference(x, params)
    assert bool(jnp.max(jnp.abs(out - ref)) < 0.1)
    print("KERNEL_OK")
</pallas_src>

<mosaic_0001>
module attributes {stable_mosaic.version = 11 : i64} {
  func.func @mlp_kernel(%arg0: i32, %arg1: memref<16x784xbf16, #tpu.memory_space<vmem>>, %arg2: memref<784x128xbf16, #tpu.memory_space<vmem>>, %arg3: memref<1x128xf32, #tpu.memory_space<vmem>>, %arg4: memref<128x128xbf16, #tpu.memory_space<vmem>>, %arg5: memref<1x128xf32, #tpu.memory_space<vmem>>, %arg6: memref<128x128xbf16, #tpu.memory_space<vmem>>, %arg7: memref<1x128xf32, #tpu.memory_space<vmem>>, %arg8: memref<128x128xbf16, #tpu.memory_space<vmem>>, %arg9: memref<1x128xf32, #tpu.memory_space<vmem>>, %arg10: memref<16x128xf32, #tpu.memory_space<vmem>>) attributes {dimension_semantics = [#tpu.dimension_semantics<parallel>], iteration_bounds = array<i64: 1>, scalar_prefetch = 0 : i64, scratch_operands = 0 : i64, tpu.core_type = #tpu.core_type<tc>, window_params = [{transform_indices = @transform_0, window_bounds = array<i64: 16, 784>}, {pipeline_mode = #tpu.pipeline_mode<synchronous>, transform_indices = @transform_1, window_bounds = array<i64: 784, 128>}, {pipeline_mode = #tpu.pipeline_mode<synchronous>, transform_indices = @transform_2, window_bounds = array<i64: 1, 128>}, {pipeline_mode = #tpu.pipeline_mode<synchronous>, transform_indices = @transform_3, window_bounds = array<i64: 128, 128>}, {pipeline_mode = #tpu.pipeline_mode<synchronous>, transform_indices = @transform_4, window_bounds = array<i64: 1, 128>}, {pipeline_mode = #tpu.pipeline_mode<synchronous>, transform_indices = @transform_5, window_bounds = array<i64: 128, 128>}, {pipeline_mode = #tpu.pipeline_mode<synchronous>, transform_indices = @transform_6, window_bounds = array<i64: 1, 128>}, {pipeline_mode = #tpu.pipeline_mode<synchronous>, transform_indices = @transform_7, window_bounds = array<i64: 128, 128>}, {pipeline_mode = #tpu.pipeline_mode<synchronous>, transform_indices = @transform_8, window_bounds = array<i64: 1, 128>}, {transform_indices = @transform_9, window_bounds = array<i64: 16, 128>}]} {
    %c0 = arith.constant 0 : index
    %c0_0 = arith.constant 0 : index
    %0 = vector.load %arg1[%c0, %c0_0] : memref<16x784xbf16, #tpu.memory_space<vmem>>, vector<16x784xbf16>
    %c0_1 = arith.constant 0 : index
    %c0_2 = arith.constant 0 : index
    %1 = vector.load %arg2[%c0_1, %c0_2] : memref<784x128xbf16, #tpu.memory_space<vmem>>, vector<784x128xbf16>
    %cst = arith.constant dense<0.000000e+00> : vector<16x128xf32>
    %2 = tpu.matmul %0, %1, %cst {dimension_numbers = #tpu.dot_dimension_numbers<[1], [0], [0], [1], [0, 0, 1, 1], [], []>} : vector<16x784xbf16>, vector<784x128xbf16>, vector<16x128xf32> -> vector<16x128xf32>
    %c0_3 = arith.constant 0 : index
    %c0_4 = arith.constant 0 : index
    %3 = vector.load %arg3[%c0_3, %c0_4] : memref<1x128xf32, #tpu.memory_space<vmem>>, vector<1x128xf32>
    %4 = vector.broadcast %3 : vector<1x128xf32> to vector<16x128xf32>
    %5 = arith.addf %2, %4 : vector<16x128xf32>
    %cst_5 = arith.constant 0.000000e+00 : f32
    %6 = vector.broadcast %cst_5 : f32 to vector<16x128xf32>
    %7 = arith.maximumf %5, %6 : vector<16x128xf32>
    %8 = arith.truncf %7 : vector<16x128xf32> to vector<16x128xbf16>
    %c0_6 = arith.constant 0 : index
    %c0_7 = arith.constant 0 : index
    %9 = vector.load %arg4[%c0_6, %c0_7] : memref<128x128xbf16, #tpu.memory_space<vmem>>, vector<128x128xbf16>
    %cst_8 = arith.constant dense<0.000000e+00> : vector<16x128xf32>
    %10 = tpu.matmul %8, %9, %cst_8 {dimension_numbers = #tpu.dot_dimension_numbers<[1], [0], [0], [1], [0, 0, 1, 1], [], []>} : vector<16x128xbf16>, vector<128x128xbf16>, vector<16x128xf32> -> vector<16x128xf32>
    %c0_9 = arith.constant 0 : index
    %c0_10 = arith.constant 0 : index
    %11 = vector.load %arg5[%c0_9, %c0_10] : memref<1x128xf32, #tpu.memory_space<vmem>>, vector<1x128xf32>
    %12 = vector.broadcast %11 : vector<1x128xf32> to vector<16x128xf32>
    %13 = arith.addf %10, %12 : vector<16x128xf32>
    %cst_11 = arith.constant 0.000000e+00 : f32
    %14 = vector.broadcast %cst_11 : f32 to vector<16x128xf32>
    %15 = arith.maximumf %13, %14 : vector<16x128xf32>
    %16 = arith.truncf %15 : vector<16x128xf32> to vector<16x128xbf16>
    %c0_12 = arith.constant 0 : index
    %c0_13 = arith.constant 0 : index
    %17 = vector.load %arg6[%c0_12, %c0_13] : memref<128x128xbf16, #tpu.memory_space<vmem>>, vector<128x128xbf16>
    %cst_14 = arith.constant dense<0.000000e+00> : vector<16x128xf32>
    %18 = tpu.matmul %16, %17, %cst_14 {dimension_numbers = #tpu.dot_dimension_numbers<[1], [0], [0], [1], [0, 0, 1, 1], [], []>} : vector<16x128xbf16>, vector<128x128xbf16>, vector<16x128xf32> -> vector<16x128xf32>
    %c0_15 = arith.constant 0 : index
    %c0_16 = arith.constant 0 : index
    %19 = vector.load %arg7[%c0_15, %c0_16] : memref<1x128xf32, #tpu.memory_space<vmem>>, vector<1x128xf32>
    %20 = vector.broadcast %19 : vector<1x128xf32> to vector<16x128xf32>
    %21 = arith.addf %18, %20 : vector<16x128xf32>
    %cst_17 = arith.constant 0.000000e+00 : f32
    %22 = vector.broadcast %cst_17 : f32 to vector<16x128xf32>
    %23 = arith.maximumf %21, %22 : vector<16x128xf32>
    %24 = arith.truncf %23 : vector<16x128xf32> to vector<16x128xbf16>
    %c0_18 = arith.constant 0 : index
    %c0_19 = arith.constant 0 : index
    %25 = vector.load %arg8[%c0_18, %c0_19] : memref<128x128xbf16, #tpu.memory_space<vmem>>, vector<128x128xbf16>
    %cst_20 = arith.constant dense<0.000000e+00> : vector<16x128xf32>
    %26 = tpu.matmul %24, %25, %cst_20 {dimension_numbers = #tpu.dot_dimension_numbers<[1], [0], [0], [1], [0, 0, 1, 1], [], []>} : vector<16x128xbf16>, vector<128x128xbf16>, vector<16x128xf32> -> vector<16x128xf32>
    %c0_21 = arith.constant 0 : index
    %c0_22 = arith.constant 0 : index
    %27 = vector.load %arg9[%c0_21, %c0_22] : memref<1x128xf32, #tpu.memory_space<vmem>>, vector<1x128xf32>
    %28 = vector.broadcast %27 : vector<1x128xf32> to vector<16x128xf32>
    %29 = arith.addf %26, %28 : vector<16x128xf32>
    %cst_23 = arith.constant dense<0xFF800000> : vector<16xf32>
    %30 = vector.multi_reduction <maximumf>, %29, %cst_23 [1] : vector<16x128xf32> to vector<16xf32>
    %31 = vector.shape_cast %30 : vector<16xf32> to vector<16x1xf32>
    %32 = vector.broadcast %31 : vector<16x1xf32> to vector<16x128xf32>
    %33 = arith.subf %29, %32 : vector<16x128xf32>
    %34 = math.exp %33 : vector<16x128xf32>
    %cst_24 = arith.constant dense<0.000000e+00> : vector<16xf32>
    %35 = vector.multi_reduction <add>, %34, %cst_24 [1] : vector<16x128xf32> to vector<16xf32>
    %36 = vector.shape_cast %35 : vector<16xf32> to vector<16x1xf32>
    %37 = math.log %36 : vector<16x1xf32>
    %38 = vector.broadcast %37 : vector<16x1xf32> to vector<16x128xf32>
    %39 = arith.subf %33, %38 : vector<16x128xf32>
    %c0_25 = arith.constant 0 : index
    %c0_26 = arith.constant 0 : index
    %40 = vector.load %arg10[%c0_25, %c0_26] : memref<16x128xf32, #tpu.memory_space<vmem>>, vector<16x128xf32>
    tpu.vector_store %arg10[%c0_25, %c0_26], %39 {strides = array<i32>} : memref<16x128xf32, #tpu.memory_space<vmem>>, vector<16x128xf32>,
    return
  }
  func.func @transform_0(%arg0: i32) -> (i32, i32) {
    %c0_i32 = arith.constant 0 : i32
    %c0_i32_0 = arith.constant 0 : i32
    return %arg0, %c0_i32 : i32, i32
  }
  func.func @transform_1(%arg0: i32) -> (i32, i32) {
    %c0_i32 = arith.constant 0 : i32
    %c0_i32_0 = arith.constant 0 : i32
    %c0_i32_1 = arith.constant 0 : i32
    return %c0_i32, %c0_i32_0 : i32, i32
  }
  func.func @transform_2(%arg0: i32) -> (i32, i32) {
    %c0_i32 = arith.constant 0 : i32
    %c0_i32_0 = arith.constant 0 : i32
    %c0_i32_1 = arith.constant 0 : i32
    return %c0_i32, %c0_i32_0 : i32, i32
  }
  func.func @transform_3(%arg0: i32) -> (i32, i32) {
    %c0_i32 = arith.constant 0 : i32
    %c0_i32_0 = arith.constant 0 : i32
    %c0_i32_1 = arith.constant 0 : i32
    return %c0_i32, %c0_i32_0 : i32, i32
  }
  func.func @transform_4(%arg0: i32) -> (i32, i32) {
    %c0_i32 = arith.constant 0 : i32
    %c0_i32_0 = arith.constant 0 : i32
    %c0_i32_1 = arith.constant 0 : i32
    return %c0_i32, %c0_i32_0 : i32, i32
  }
  func.func @transform_5(%arg0: i32) -> (i32, i32) {
    %c0_i32 = arith.constant 0 : i32
    %c0_i32_0 = arith.constant 0 : i32
    %c0_i32_1 = arith.constant 0 : i32
    return %c0_i32, %c0_i32_0 : i32, i32
  }
  func.func @transform_6(%arg0: i32) -> (i32, i32) {
    %c0_i32 = arith.constant 0 : i32
    %c0_i32_0 = arith.constant 0 : i32
    %c0_i32_1 = arith.constant 0 : i32
    return %c0_i32, %c0_i32_0 : i32, i32
  }
  func.func @transform_7(%arg0: i32) -> (i32, i32) {
    %c0_i32 = arith.constant 0 : i32
    %c0_i32_0 = arith.constant 0 : i32
    %c0_i32_1 = arith.constant 0 : i32
    return %c0_i32, %c0_i32_0 : i32, i32
  }
  func.func @transform_8(%arg0: i32) -> (i32, i32) {
    %c0_i32 = arith.constant 0 : i32
    %c0_i32_0 = arith.constant 0 : i32
    %c0_i32_1 = arith.constant 0 : i32
    return %c0_i32, %c0_i32_0 : i32, i32
  }
  func.func @transform_9(%arg0: i32) -> (i32, i32) {
    %c0_i32 = arith.constant 0 : i32
    %c0_i32_0 = arith.constant 0 : i32
    return %arg0, %c0_i32 : i32, i32
  }
}

</mosaic_0001>

<llo_original>
// kernel: tpu_custom_call.1
$region0: #{tpu_custom_call.1}
  #allocation0 [shape = 'u32[]', space=smem, size = 0x4, offset = 0x4, fixed_abs, tag = 'smem constant byte address 0x4 - core index']
  #allocation1 [shape = 'u32[144,128]{1,0:T(1,128)}', space=vmem, size = 0x12000, scoped, tag = 'internal scratch']
  %s0 = inlined_call_operand.hbm [shape: bf16[16,784], index: 0, kind: input, shape index: {}]
  %s1 = inlined_call_operand.hbm [shape: bf16[784,128], index: 1, kind: input, shape index: {}]
  %s2 = inlined_call_operand.vmem [shape: f32[1,128], index: 2, kind: input, shape index: {}]
  %s3 = inlined_call_operand.hbm [shape: bf16[128,128], index: 3, kind: input, shape index: {}]
  %s4 = inlined_call_operand.vmem [shape: f32[1,128], index: 4, kind: input, shape index: {}]
  %s5 = inlined_call_operand.hbm [shape: bf16[128,128], index: 5, kind: input, shape index: {}]
  %s6 = inlined_call_operand.vmem [shape: f32[1,128], index: 6, kind: input, shape index: {}]
  %s7 = inlined_call_operand.hbm [shape: bf16[128,128], index: 7, kind: input, shape index: {}]
  %s8 = inlined_call_operand.vmem [shape: f32[1,128], index: 8, kind: input, shape index: {}]
  %s9 = inlined_call_operand.hbm [shape: f32[16,128], index: 9, kind: output, shape index: {}]
  %s10 = sld [smem:[#allocation0]]
  $region66: #{tpu_custom_call.1} parent=0
    _
  %s12 = ssub.s32 1, %s10
  %s13 = scalar_select 0, %s12, %s10
  $region1: #{tpu_custom_call.1} parent=0
    #allocation2 [shape = 'u8[28672]{0}', space=vmem, size = 0x7000, scoped, tag = 'input window, operand 0, single buffered']
    #allocation3 [shape = 's32[1]{0}', space=sflag, size = 0x4, scoped, tag = 'scoped memory for tpu_custom_call.1']
    #allocation4 [shape = 's32[1]{0}', space=sflag, size = 0x4, scoped, tag = 'scoped memory for tpu_custom_call.1']
    #allocation5 [shape = 'u8[200704]{0}', space=vmem, size = 0x31000, scoped, tag = 'input window, operand 1, single buffered']
    #allocation6 [shape = 's32[1]{0}', space=sflag, size = 0x4, scoped, tag = 'scoped memory for tpu_custom_call.1']
    #allocation7 [shape = 'u8[32768]{0}', space=vmem, size = 0x8000, scoped, tag = 'input window, operand 3, single buffered']
    #allocation8 [shape = 'u8[32768]{0}', space=vmem, size = 0x8000, scoped, tag = 'input window, operand 5, single buffered']
    #allocation9 [shape = 's32[1]{0}', space=sflag, size = 0x4, scoped, tag = 'scoped memory for tpu_custom_call.1']
    #allocation10 [shape = 'u8[32768]{0}', space=vmem, size = 0x8000, scoped, tag = 'input window, operand 7, single buffered']
    #allocation11 [shape = 'u8[8192]{0}', space=vmem, size = 0x2000, scoped, tag = 'output window, operand 0, single buffered']
    %14 = vsyncpa [#allocation3], 0
    %15 = vsyncpa [#allocation6], 0
    %16 = vsyncpa [#allocation9], 0
    %17 = vsyncpa [#allocation4], 0
    // Predicated region
    $region2: #{tpu_custom_call.1} parent=1 // pred_check
      _
    $region3: #{tpu_custom_call.1} parent=1 // pred_check_branch
      %19 = sbr.rel (0) target = $region5
    $region4: #{tpu_custom_call.1} parent=1 // pred_region
      %s21 = ssub.s32 896, 896
      %22 = vsyncadd [#allocation3], %s21
      %s23 = sshll.u32 [#allocation2], 4
      %s24 = int_to_ptr.vmem [resolvable:$true] %s23
      %29 = dma.hbm_to_vmem [thread:$0]  %s0, 896, %s24, [#allocation3], 448, 448, 28
    $region5: #{tpu_custom_call.1} parent=1 // pred_fallthru
      _
    // Predicated region
    $region6: #{tpu_custom_call.1} parent=1 // pred_check
      _
    $region7: #{tpu_custom_call.1} parent=1 // pred_check_branch
      %31 = sbr.rel (0) target = $region9
    $region8: #{tpu_custom_call.1} parent=1 // pred_region
      %s33 = ssub.s32 6272, 6272
      %34 = vsyncadd [#allocation6], %s33
      %s35 = sshll.u32 [#allocation5], 4
      %s36 = int_to_ptr.vmem [resolvable:$true] %s35
      %41 = dma.hbm_to_vmem [thread:$0]  %s1, 6272, %s36, [#allocation6], 64, 64, 4
    $region9: #{tpu_custom_call.1} parent=1 // pred_fallthru
      _
    // Predicated region
    $region10: #{tpu_custom_call.1} parent=1 // pred_check
      _
    $region11: #{tpu_custom_call.1} parent=1 // pred_check_branch
      %43 = sbr.rel (0) target = $region13
    $region12: #{tpu_custom_call.1} parent=1 // pred_region
      _
    $region13: #{tpu_custom_call.1} parent=1 // pred_fallthru
      _
    // Predicated region
    $region14: #{tpu_custom_call.1} parent=1 // pred_check
      _
    $region15: #{tpu_custom_call.1} parent=1 // pred_check_branch
      %45 = sbr.rel (0) target = $region17
    $region16: #{tpu_custom_call.1} parent=1 // pred_region
      %s47 = ssub.s32 1024, 1024
      %48 = vsyncadd [#allocation6], %s47
      %s49 = sshll.u32 [#allocation7], 4
      %s50 = int_to_ptr.vmem [resolvable:$true] %s49
      %55 = dma.hbm_to_vmem [thread:$0]  %s3, 1024, %s50, [#allocation6], 64, 64, 4
    $region17: #{tpu_custom_call.1} parent=1 // pred_fallthru
      _
    // Predicated region
    $region18: #{tpu_custom_call.1} parent=1 // pred_check
      _
    $region19: #{tpu_custom_call.1} parent=1 // pred_check_branch
      %57 = sbr.rel (0) target = $region21
    $region20: #{tpu_custom_call.1} parent=1 // pred_region
      _
    $region21: #{tpu_custom_call.1} parent=1 // pred_fallthru
      _
    // Predicated region
    $region22: #{tpu_custom_call.1} parent=1 // pred_check
      _
    $region23: #{tpu_custom_call.1} parent=1 // pred_check_branch
      %59 = sbr.rel (0) target = $region25
    $region24: #{tpu_custom_call.1} parent=1 // pred_region
      %s61 = ssub.s32 1024, 1024
      %62 = vsyncadd [#allocation9], %s61
      %s63 = sshll.u32 [#allocation8], 4
      %s64 = int_to_ptr.vmem [resolvable:$true] %s63
      %69 = dma.hbm_to_vmem [thread:$0]  %s5, 1024, %s64, [#allocation9], 64, 64, 4
    $region25: #{tpu_custom_call.1} parent=1 // pred_fallthru
      _
    // Predicated region
    $region26: #{tpu_custom_call.1} parent=1 // pred_check
      _
    $region27: #{tpu_custom_call.1} parent=1 // pred_check_branch
      %71 = sbr.rel (0) target = $region29
    $region28: #{tpu_custom_call.1} parent=1 // pred_region
      _
    $region29: #{tpu_custom_call.1} parent=1 // pred_fallthru
      _
    // Predicated region
    $region30: #{tpu_custom_call.1} parent=1 // pred_check
      _
    $region31: #{tpu_custom_call.1} parent=1 // pred_check_branch
      %73 = sbr.rel (0) target = $region33
    $region32: #{tpu_custom_call.1} parent=1 // pred_region
      %s75 = ssub.s32 1024, 1024
      %76 = vsyncadd [#allocation9], %s75
      %s77 = sshll.u32 [#allocation10], 4
      %s78 = int_to_ptr.vmem [resolvable:$true] %s77
      %83 = dma.hbm_to_vmem [thread:$0]  %s7, 1024, %s78, [#allocation9], 64, 64, 4
    $region33: #{tpu_custom_call.1} parent=1 // pred_fallthru
      _
    // Predicated region
    $region34: #{tpu_custom_call.1} parent=1 // pred_check
      _
    $region35: #{tpu_custom_call.1} parent=1 // pred_check_branch
      %85 = sbr.rel (0) target = $region37
    $region36: #{tpu_custom_call.1} parent=1 // pred_region
      _
    $region37: #{tpu_custom_call.1} parent=1 // pred_fallthru
      _
    // Predicated region
    $region38: #{tpu_custom_call.1} parent=1 // pred_check
      _
    $region39: #{tpu_custom_call.1} parent=1 // pred_check_branch
      %87 = sbr.rel (0) target = $region41
    $region40: #{tpu_custom_call.1} parent=1 // pred_region
      %88 = dma.done [#allocation3], 896
    $region41: #{tpu_custom_call.1} parent=1 // pred_fallthru
      _
    // Predicated region
    $region42: #{tpu_custom_call.1} parent=1 // pred_check
      _
    $region43: #{tpu_custom_call.1} parent=1 // pred_check_branch
      %90 = sbr.rel (0) target = $region45
    $region44: #{tpu_custom_call.1} parent=1 // pred_region
      %91 = dma.done [#allocation6], 6272
    $region45: #{tpu_custom_call.1} parent=1 // pred_fallthru
      _
    // Predicated region
    $region46: #{tpu_custom_call.1} parent=1 // pred_check
      _
    $region47: #{tpu_custom_call.1} parent=1 // pred_check_branch
      %93 = sbr.rel (0) target = $region49
    $region48: #{tpu_custom_call.1} parent=1 // pred_region
      %94 = dma.done [#allocation6], 1024
    $region49: #{tpu_custom_call.1} parent=1 // pred_fallthru
      _
    // Predicated region
    $region50: #{tpu_custom_call.1} parent=1 // pred_check
      _
    $region51: #{tpu_custom_call.1} parent=1 // pred_check_branch
      %96 = sbr.rel (0) target = $region53
    $region52: #{tpu_custom_call.1} parent=1 // pred_region
      %97 = dma.done [#allocation9], 1024
    $region53: #{tpu_custom_call.1} parent=1 // pred_fallthru
      _
    // Predicated region
    $region54: #{tpu_custom_call.1} parent=1 // pred_check
      _
    $region55: #{tpu_custom_call.1} parent=1 // pred_check_branch
      %99 = sbr.rel (0) target = $region57
    $region56: #{tpu_custom_call.1} parent=1 // pred_region
      %100 = dma.done [#allocation9], 1024
    $region57: #{tpu_custom_call.1} parent=1 // pred_fallthru
      _
    %v102 = vld [vmem:[#allocation2] sm:$0xff]
    %v103 = vld [vmem:[#allocation2 + $0x8] sm:$0xff]
    %v104 = vld [vmem:[#allocation2 + $0x10] sm:$0xff]
    %v105 = vld [vmem:[#allocation2 + $0x18] sm:$0xf]
    %v106 = vld [vmem:[#allocation2 + $0x1c] sm:$0xff]
    %v107 = vld [vmem:[#allocation2 + $0x24] sm:$0xff]
    %v108 = vld [vmem:[#allocation2 + $0x2c] sm:$0xff]
    %v109 = vld [vmem:[#allocation2 + $0x34] sm:$0xf]
    %v110 = vld [vmem:[#allocation5] sm:$0xf]
    %v111 = vld [vmem:[#allocation5 + $0x4] sm:$0xf]
    %v112 = vld [vmem:[#allocation5 + $0x8] sm:$0xf]
    %v113 = vld [vmem:[#allocation5 + $0xc] sm:$0xf]
    %v114 = vld [vmem:[#allocation5 + $0x10] sm:$0xf]
    %v115 = vld [vmem:[#allocation5 + $0x14] sm:$0xf]
    %v116 = vld [vmem:[#allocation5 + $0x18] sm:$0xf]
    %v117 = vld [vmem:[#allocation5 + $0x1c] sm:$0xf]
    %v118 = vld [vmem:[#allocation5 + $0x20] sm:$0xf]
    %v119 = vld [vmem:[#allocation5 + $0x24] sm:$0xf]
    %v120 = vld [vmem:[#allocation5 + $0x28] sm:$0xf]
    %v121 = vld [vmem:[#allocation5 + $0x2c] sm:$0xf]
    %v122 = vld [vmem:[#allocation5 + $0x30] sm:$0xf]
    %v123 = vld [vmem:[#allocation5 + $0x34] sm:$0xf]
    %v124 = vld [vmem:[#allocation5 + $0x38] sm:$0xf]
    %v125 = vld [vmem:[#allocation5 + $0x3c] sm:$0xf]
    %v126 = vld [vmem:[#allocation5 + $0x40] sm:$0xf]
    %v127 = vld [vmem:[#allocation5 + $0x44] sm:$0xf]
    %v128 = vld [vmem:[#allocation5 + $0x48] sm:$0xf]
    %v129 = vld [vmem:[#allocation5 + $0x4c] sm:$0xf]
    %v130 = vld [vmem:[#allocation5 + $0x50] sm:$0xf]
    %v131 = vld [vmem:[#allocation5 + $0x54] sm:$0xf]
    %v132 = vld [vmem:[#allocation5 + $0x58] sm:$0xf]
    %v133 = vld [vmem:[#allocation5 + $0x5c] sm:$0xf]
    %v134 = vld [vmem:[#allocation5 + $0x60] sm:$0xf]
    %v135 = vld [vmem:[#allocation5 + $0x64] sm:$0xf]
    %v136 = vld [vmem:[#allocation5 + $0x68] sm:$0xf]
    %v137 = vld [vmem:[#allocation5 + $0x6c] sm:$0xf]
    %v138 = vld [vmem:[#allocation5 + $0x70] sm:$0xf]
    %v139 = vld [vmem:[#allocation5 + $0x74] sm:$0xf]
    %v140 = vld [vmem:[#allocation5 + $0x78] sm:$0xf]
    %v141 = vld [vmem:[#allocation5 + $0x7c] sm:$0xf]
    %v142 = vld [vmem:[#allocation5 + $0x80] sm:$0xf]
    %v143 = vld [vmem:[#allocation5 + $0x84] sm:$0xf]
    %v144 = vld [vmem:[#allocation5 + $0x88] sm:$0xf]
    %v145 = vld [vmem:[#allocation5 + $0x8c] sm:$0xf]
    %v146 = vld [vmem:[#allocation5 + $0x90] sm:$0xf]
    %v147 = vld [vmem:[#allocation5 + $0x94] sm:$0xf]
    %v148 = vld [vmem:[#allocation5 + $0x98] sm:$0xf]
    %v149 = vld [vmem:[#allocation5 + $0x9c] sm:$0xf]
    %v150 = vld [vmem:[#allocation5 + $0xa0] sm:$0xf]
    %v151 = vld [vmem:[#allocation5 + $0xa4] sm:$0xf]
    %v152 = vld [vmem:[#allocation5 + $0xa8] sm:$0xf]
    %v153 = vld [vmem:[#allocation5 + $0xac] sm:$0xf]
    %v154 = vld [vmem:[#allocation5 + $0xb0] sm:$0xf]
    %v155 = vld [vmem:[#allocation5 + $0xb4] sm:$0xf]
    %v156 = vld [vmem:[#allocation5 + $0xb8] sm:$0xf]
    %v157 = vld [vmem:[#allocation5 + $0xbc] sm:$0xf]
    %v158 = vld [vmem:[#allocation5 + $0xc0] sm:$0xf]
    %v159 = vld [vmem:[#allocation5 + $0xc4] sm:$0xf]
    %v160 = vld [vmem:[#allocation5 + $0xc8] sm:$0xf]
    %v161 = vld [vmem:[#allocation5 + $0xcc] sm:$0xf]
    %v162 = vld [vmem:[#allocation5 + $0xd0] sm:$0xf]
    %v163 = vld [vmem:[#allocation5 + $0xd4] sm:$0xf]
    %v164 = vld [vmem:[#allocation5 + $0xd8] sm:$0xf]
    %v165 = vld [vmem:[#allocation5 + $0xdc] sm:$0xf]
    %v166 = vld [vmem:[#allocation5 + $0xe0] sm:$0xf]
    %v167 = vld [vmem:[#allocation5 + $0xe4] sm:$0xf]
    %v168 = vld [vmem:[#allocation5 + $0xe8] sm:$0xf]
    %v169 = vld [vmem:[#allocation5 + $0xec] sm:$0xf]
    %v170 = vld [vmem:[#allocation5 + $0xf0] sm:$0xf]
    %v171 = vld [vmem:[#allocation5 + $0xf4] sm:$0xf]
    %v172 = vld [vmem:[#allocation5 + $0xf8] sm:$0xf]
    %v173 = vld [vmem:[#allocation5 + $0xfc] sm:$0xf]
    %v174 = vld [vmem:[#allocation5 + $0x100] sm:$0xf]
    %v175 = vld [vmem:[#allocation5 + $0x104] sm:$0xf]
    %v176 = vld [vmem:[#allocation5 + $0x108] sm:$0xf]
    %v177 = vld [vmem:[#allocation5 + $0x10c] sm:$0xf]
    %v178 = vld [vmem:[#allocation5 + $0x110] sm:$0xf]
    %v179 = vld [vmem:[#allocation5 + $0x114] sm:$0xf]
    %v180 = vld [vmem:[#allocation5 + $0x118] sm:$0xf]
    %v181 = vld [vmem:[#allocation5 + $0x11c] sm:$0xf]
    %v182 = vld [vmem:[#allocation5 + $0x120] sm:$0xf]
    %v183 = vld [vmem:[#allocation5 + $0x124] sm:$0xf]
    %v184 = vld [vmem:[#allocation5 + $0x128] sm:$0xf]
    %v185 = vld [vmem:[#allocation5 + $0x12c] sm:$0xf]
    %v186 = vld [vmem:[#allocation5 + $0x130] sm:$0xf]
    %v187 = vld [vmem:[#allocation5 + $0x134] sm:$0xf]
    %v188 = vld [vmem:[#allocation5 + $0x138] sm:$0xf]
    %v189 = vld [vmem:[#allocation5 + $0x13c] sm:$0xf]
    %v190 = vld [vmem:[#allocation5 + $0x140] sm:$0xf]
    %v191 = vld [vmem:[#allocation5 + $0x144] sm:$0xf]
    %v192 = vld [vmem:[#allocation5 + $0x148] sm:$0xf]
    %v193 = vld [vmem:[#allocation5 + $0x14c] sm:$0xf]
    %v194 = vld [vmem:[#allocation5 + $0x150] sm:$0xf]
    %v195 = vld [vmem:[#allocation5 + $0x154] sm:$0xf]
    %v196 = vld [vmem:[#allocation5 + $0x158] sm:$0xf]
    %v197 = vld [vmem:[#allocation5 + $0x15c] sm:$0xf]
    %v198 = vld [vmem:[#allocation5 + $0x160] sm:$0xf]
    %v199 = vld [vmem:[#allocation5 + $0x164] sm:$0xf]
    %v200 = vld [vmem:[#allocation5 + $0x168] sm:$0xf]
    %v201 = vld [vmem:[#allocation5 + $0x16c] sm:$0xf]
    %v202 = vld [vmem:[#allocation5 + $0x170] sm:$0xf]
    %v203 = vld [vmem:[#allocation5 + $0x174] sm:$0xf]
    %v204 = vld [vmem:[#allocation5 + $0x178] sm:$0xf]
    %v205 = vld [vmem:[#allocation5 + $0x17c] sm:$0xf]
    %v206 = vld [vmem:[#allocation5 + $0x180] sm:$0xf]
    %v207 = vld [vmem:[#allocation5 + $0x184] sm:$0xf]
    %v208 = vld [vmem:[%s2] sm:$0x1]
    %v210 = vlaneseq
    %v211 = vshrl.u32 %v210, 7
    %v212 = vsub.s32 0, %v211
    %v213 = vrot.slane %v208, %v212
    %v223 = vunpack.c.l.b16 %v102
    %v224 = vunpack.c.h.b16 %v102
    %v225 = vunpack.c.l.b16 %v103
    %v226 = vunpack.c.h.b16 %v103
    %v227 = vunpack.c.l.b16 %v104
    %v228 = vunpack.c.h.b16 %v104
    %v229 = vunpack.c.l.b16 %v105
    %v230 = vunpack.c.l.b16 %v106
    %v231 = vunpack.c.h.b16 %v106
    %v232 = vunpack.c.l.b16 %v107
    %v233 = vunpack.c.h.b16 %v107
    %v234 = vunpack.c.l.b16 %v108
    %v235 = vunpack.c.h.b16 %v108
    %v236 = vunpack.c.l.b16 %v109
    %v237 = vpack.c.b16 %v230, %v223
    %v238 = vpack.c.b16 %v231, %v224
    %v239 = vpack.c.b16 %v232, %v225
    %v240 = vpack.c.b16 %v233, %v226
    %v241 = vpack.c.b16 %v234, %v227
    %v242 = vpack.c.b16 %v235, %v228
    %v243 = vpack.c.b16 %v236, %v229
    %v348 = vunpack.c.l.b16 %v110
    %v349 = vunpack.c.l.b16 %v111
    %v350 = vunpack.c.l.b16 %v112
    %v351 = vunpack.c.l.b16 %v113
    %v352 = vunpack.c.l.b16 %v114
    %v353 = vunpack.c.l.b16 %v115
    %v354 = vunpack.c.l.b16 %v116
    %v355 = vunpack.c.l.b16 %v117
    %v356 = vunpack.c.l.b16 %v118
    %v357 = vunpack.c.l.b16 %v119
    %v358 = vunpack.c.l.b16 %v120
    %v359 = vunpack.c.l.b16 %v121
    %v360 = vunpack.c.l.b16 %v122
    %v361 = vunpack.c.l.b16 %v123
    %v362 = vunpack.c.l.b16 %v124
    %v363 = vunpack.c.l.b16 %v125
    %v364 = vunpack.c.l.b16 %v126
    %v365 = vunpack.c.l.b16 %v127
    %v366 = vunpack.c.l.b16 %v128
    %v367 = vunpack.c.l.b16 %v129
    %v368 = vunpack.c.l.b16 %v130
    %v369 = vunpack.c.l.b16 %v131
    %v370 = vunpack.c.l.b16 %v132
    %v371 = vunpack.c.l.b16 %v133
    %v372 = vunpack.c.l.b16 %v134
    %v373 = vunpack.c.l.b16 %v135
    %v374 = vunpack.c.l.b16 %v136
    %v375 = vunpack.c.l.b16 %v137
    %v376 = vunpack.c.l.b16 %v138
    %v377 = vunpack.c.l.b16 %v139
    %v378 = vunpack.c.l.b16 %v140
    %v379 = vunpack.c.l.b16 %v141
    %v380 = vunpack.c.l.b16 %v142
    %v381 = vunpack.c.l.b16 %v143
    %v382 = vunpack.c.l.b16 %v144
    %v383 = vunpack.c.l.b16 %v145
    %v384 = vunpack.c.l.b16 %v146
    %v385 = vunpack.c.l.b16 %v147
    %v386 = vunpack.c.l.b16 %v148
    %v387 = vunpack.c.l.b16 %v149
    %v388 = vunpack.c.l.b16 %v150
    %v389 = vunpack.c.l.b16 %v151
    %v390 = vunpack.c.l.b16 %v152
    %v391 = vunpack.c.l.b16 %v153
    %v392 = vunpack.c.l.b16 %v154
    %v393 = vunpack.c.l.b16 %v155
    %v394 = vunpack.c.l.b16 %v156
    %v395 = vunpack.c.l.b16 %v157
    %v396 = vunpack.c.l.b16 %v158
    %v397 = vunpack.c.l.b16 %v159
    %v398 = vunpack.c.l.b16 %v160
    %v399 = vunpack.c.l.b16 %v161
    %v400 = vunpack.c.l.b16 %v162
    %v401 = vunpack.c.l.b16 %v163
    %v402 = vunpack.c.l.b16 %v164
    %v403 = vunpack.c.l.b16 %v165
    %v404 = vunpack.c.l.b16 %v166
    %v405 = vunpack.c.l.b16 %v167
    %v406 = vunpack.c.l.b16 %v168
    %v407 = vunpack.c.l.b16 %v169
    %v408 = vunpack.c.l.b16 %v170
    %v409 = vunpack.c.l.b16 %v171
    %v410 = vunpack.c.l.b16 %v172
    %v411 = vunpack.c.l.b16 %v173
    %v412 = vunpack.c.l.b16 %v174
    %v413 = vunpack.c.l.b16 %v175
    %v414 = vunpack.c.l.b16 %v176
    %v415 = vunpack.c.l.b16 %v177
    %v416 = vunpack.c.l.b16 %v178
    %v417 = vunpack.c.l.b16 %v179
    %v418 = vunpack.c.l.b16 %v180
    %v419 = vunpack.c.l.b16 %v181
    %v420 = vunpack.c.l.b16 %v182
    %v421 = vunpack.c.l.b16 %v183
    %v422 = vunpack.c.l.b16 %v184
    %v423 = vunpack.c.l.b16 %v185
    %v424 = vunpack.c.l.b16 %v186
    %v425 = vunpack.c.l.b16 %v187
    %v426 = vunpack.c.l.b16 %v188
    %v427 = vunpack.c.l.b16 %v189
    %v428 = vunpack.c.l.b16 %v190
    %v429 = vunpack.c.l.b16 %v191
    %v430 = vunpack.c.l.b16 %v192
    %v431 = vunpack.c.l.b16 %v193
    %v432 = vunpack.c.l.b16 %v194
    %v433 = vunpack.c.l.b16 %v195
    %v434 = vunpack.c.l.b16 %v196
    %v435 = vunpack.c.l.b16 %v197
    %v436 = vunpack.c.l.b16 %v198
    %v437 = vunpack.c.l.b16 %v199
    %v438 = vunpack.c.l.b16 %v200
    %v439 = vunpack.c.l.b16 %v201
    %v440 = vunpack.c.l.b16 %v202
    %v441 = vunpack.c.l.b16 %v203
    %v442 = vunpack.c.l.b16 %v204
    %v443 = vunpack.c.l.b16 %v205
    %v444 = vunpack.c.l.b16 %v206
    %v445 = vunpack.c.l.b16 %v207
    %v446 = vpack.c.b16 %v349, %v348
    %v447 = vpack.c.b16 %v351, %v350
    %v448 = vpack.c.b16 %v353, %v352
    %v449 = vpack.c.b16 %v355, %v354
    %v450 = vpack.c.b16 %v357, %v356
    %v451 = vpack.c.b16 %v359, %v358
    %v452 = vpack.c.b16 %v361, %v360
    %v453 = vpack.c.b16 %v363, %v362
    %v454 = vpack.c.b16 %v365, %v364
    %v455 = vpack.c.b16 %v367, %v366
    %v456 = vpack.c.b16 %v369, %v368
    %v457 = vpack.c.b16 %v371, %v370
    %v458 = vpack.c.b16 %v373, %v372
    %v459 = vpack.c.b16 %v375, %v374
    %v460 = vpack.c.b16 %v377, %v376
    %v461 = vpack.c.b16 %v379, %v378
    %v462 = vpack.c.b16 %v381, %v380
    %v463 = vpack.c.b16 %v383, %v382
    %v464 = vpack.c.b16 %v385, %v384
    %v465 = vpack.c.b16 %v387, %v386
    %v466 = vpack.c.b16 %v389, %v388
    %v467 = vpack.c.b16 %v391, %v390
    %v468 = vpack.c.b16 %v393, %v392
    %v469 = vpack.c.b16 %v395, %v394
    %v470 = vpack.c.b16 %v397, %v396
    %v471 = vpack.c.b16 %v399, %v398
    %v472 = vpack.c.b16 %v401, %v400
    %v473 = vpack.c.b16 %v403, %v402
    %v474 = vpack.c.b16 %v405, %v404
    %v475 = vpack.c.b16 %v407, %v406
    %v476 = vpack.c.b16 %v409, %v408
    %v477 = vpack.c.b16 %v411, %v410
    %v478 = vpack.c.b16 %v413, %v412
    %v479 = vpack.c.b16 %v415, %v414
    %v480 = vpack.c.b16 %v417, %v416
    %v481 = vpack.c.b16 %v419, %v418
    %v482 = vpack.c.b16 %v421, %v420
    %v483 = vpack.c.b16 %v423, %v422
    %v484 = vpack.c.b16 %v425, %v424
    %v485 = vpack.c.b16 %v427, %v426
    %v486 = vpack.c.b16 %v429, %v428
    %v487 = vpack.c.b16 %v431, %v430
    %v488 = vpack.c.b16 %v433, %v432
    %v489 = vpack.c.b16 %v435, %v434
    %v490 = vpack.c.b16 %v437, %v436
    %v491 = vpack.c.b16 %v439, %v438
    %v492 = vpack.c.b16 %v441, %v440
    %v493 = vpack.c.b16 %v443, %v442
    %v494 = vpack.c.b16 %v445, %v444
    %vm544 = vcmask 130048
    %v546 = vsel %vm544, %v243, 0
    %548 = vmatprep.subr.bf16.mxu0 0
    %549 = vmatpush1.bf16.msra.mxu0 %v453
    %550 = vmatprep.subr.bf16.mxu0 0
    %551 = vmatpush1.bf16.msra.mxu0 %v452
    %552 = vmatprep.subr.bf16.mxu0 0
    %553 = vmatpush1.bf16.msra.mxu0 %v451
    %554 = vmatprep.subr.bf16.mxu0 0
    %555 = vmatpush1.bf16.msra.mxu0 %v450
    %556 = vmatprep.subr.bf16.mxu0 0
    %557 = vmatpush1.bf16.msra.mxu0 %v449
    %558 = vmatprep.subr.bf16.mxu0 0
    %559 = vmatpush1.bf16.msra.mxu0 %v448
    %560 = vmatprep.subr.bf16.mxu0 0
    %561 = vmatpush1.bf16.msra.mxu0 %v447
    %562 = vmatprep.subr.bf16.mxu0 0
    %563 = vmatpush1.bf16.msra.mxu0 %v446
    %564 = vmatprep.subr.bf16.mxu0 0
    %565 = vmatpush2.bf16.msra.mxu0 %v461
    %566 = vmatprep.subr.bf16.mxu0 0
    %567 = vmatpush2.bf16.msra.mxu0 %v460
    %568 = vmatprep.subr.bf16.mxu0 0
    %569 = vmatpush2.bf16.msra.mxu0 %v459
    %570 = vmatprep.subr.bf16.mxu0 0
    %571 = vmatpush2.bf16.msra.mxu0 %v458
    %572 = vmatprep.subr.bf16.mxu0 0
    %573 = vmatpush2.bf16.msra.mxu0 %v457
    %574 = vmatprep.subr.bf16.mxu0 0
    %575 = vmatpush2.bf16.msra.mxu0 %v456
    %576 = vmatprep.subr.bf16.mxu0 0
    %577 = vmatpush2.bf16.msra.mxu0 %v455
    %578 = vmatprep.subr.bf16.mxu0 0
    %579 = vmatpush2.bf16.msra.mxu0 %v454
    %580 = vmatprep.mubr.bf16.mxu0 %v238
    %581 = vmatmul.mubr.bf16.gmra.mxu0 %v237
    %v582 = vpop.f32.mrf.mxu0
    %v583 = vadd.f32 %v213, %v582
    %v584 = vpop.f32.mrf.mxu0
    %v585 = vpop.f32.mrf.mxu0
    %v586 = vadd.f32 %v213, %v585
    %v587 = vpop.f32.mrf.mxu0
    %588 = vdwg.mxu0
    %589 = vmatprep.subr.bf16.mxu0 0
    %590 = vmatpush1.bf16.msra.mxu0 %v469
    %591 = vmatprep.subr.bf16.mxu0 0
    %592 = vmatpush1.bf16.msra.mxu0 %v468
    %593 = vmatprep.subr.bf16.mxu0 0
    %594 = vmatpush1.bf16.msra.mxu0 %v467
    %595 = vmatprep.subr.bf16.mxu0 0
    %596 = vmatpush1.bf16.msra.mxu0 %v466
    %597 = vmatprep.subr.bf16.mxu0 0
    %598 = vmatpush1.bf16.msra.mxu0 %v465
    %599 = vmatprep.subr.bf16.mxu0 0
    %600 = vmatpush1.bf16.msra.mxu0 %v464
    %601 = vmatprep.subr.bf16.mxu0 0
    %602 = vmatpush1.bf16.msra.mxu0 %v463
    %603 = vmatprep.subr.bf16.mxu0 0
    %604 = vmatpush1.bf16.msra.mxu0 %v462
    %605 = vmatprep.subr.bf16.mxu0 0
    %606 = vmatpush2.bf16.msra.mxu0 %v477
    %607 = vmatprep.subr.bf16.mxu0 0
    %608 = vmatpush2.bf16.msra.mxu0 %v476
    %609 = vmatprep.subr.bf16.mxu0 0
    %610 = vmatpush2.bf16.msra.mxu0 %v475
    %611 = vmatprep.subr.bf16.mxu0 0
    %612 = vmatpush2.bf16.msra.mxu0 %v474
    %613 = vmatprep.subr.bf16.mxu0 0
    %614 = vmatpush2.bf16.msra.mxu0 %v473
    %615 = vmatprep.subr.bf16.mxu0 0
    %616 = vmatpush2.bf16.msra.mxu0 %v472
    %617 = vmatprep.subr.bf16.mxu0 0
    %618 = vmatpush2.bf16.msra.mxu0 %v471
    %619 = vmatprep.subr.bf16.mxu0 0
    %620 = vmatpush2.bf16.msra.mxu0 %v470
    %621 = vmatprep.mubr.bf16.mxu0 %v240
    %622 = vmatmul.mubr.bf16.gmra.mxu0 %v239
    %v623 = vpop.f32.mrf.mxu0
    %v624 = vadd.f32 %v583, %v623
    %v625 = vpop.f32.mrf.mxu0
    %v626 = vpop.f32.mrf.mxu0
    %v627 = vadd.f32 %v586, %v626
    %v628 = vpop.f32.mrf.mxu0
    %629 = vdwg.mxu0
    %630 = vmatprep.subr.bf16.mxu0 0
    %631 = vmatpush1.bf16.msra.mxu0 %v485
    %632 = vmatprep.subr.bf16.mxu0 0
    %633 = vmatpush1.bf16.msra.mxu0 %v484
    %634 = vmatprep.subr.bf16.mxu0 0
    %635 = vmatpush1.bf16.msra.mxu0 %v483
    %636 = vmatprep.subr.bf16.mxu0 0
    %637 = vmatpush1.bf16.msra.mxu0 %v482
    %638 = vmatprep.subr.bf16.mxu0 0
    %639 = vmatpush1.bf16.msra.mxu0 %v481
    %640 = vmatprep.subr.bf16.mxu0 0
    %641 = vmatpush1.bf16.msra.mxu0 %v480
    %642 = vmatprep.subr.bf16.mxu0 0
    %643 = vmatpush1.bf16.msra.mxu0 %v479
    %644 = vmatprep.subr.bf16.mxu0 0
    %645 = vmatpush1.bf16.msra.mxu0 %v478
    %646 = vmatprep.subr.bf16.mxu0 0
    %647 = vmatpush2.bf16.msra.mxu0 %v493
    %648 = vmatprep.subr.bf16.mxu0 0
    %649 = vmatpush2.bf16.msra.mxu0 %v492
    %650 = vmatprep.subr.bf16.mxu0 0
    %651 = vmatpush2.bf16.msra.mxu0 %v491
    %652 = vmatprep.subr.bf16.mxu0 0
    %653 = vmatpush2.bf16.msra.mxu0 %v490
    %654 = vmatprep.subr.bf16.mxu0 0
    %655 = vmatpush2.bf16.msra.mxu0 %v489
    %656 = vmatprep.subr.bf16.mxu0 0
    %657 = vmatpush2.bf16.msra.mxu0 %v488
    %658 = vmatprep.subr.bf16.mxu0 0
    %659 = vmatpush2.bf16.msra.mxu0 %v487
    %660 = vmatprep.subr.bf16.mxu0 0
    %661 = vmatpush2.bf16.msra.mxu0 %v486
    %662 = vmatprep.mubr.bf16.mxu0 %v242
    %663 = vmatmul.mubr.bf16.gmra.mxu0 %v241
    %v664 = vpop.f32.mrf.mxu0
    %v665 = vadd.f32 %v624, %v664
    %v666 = vpop.f32.mrf.mxu0
    %v667 = vpop.f32.mrf.mxu0
    %v668 = vadd.f32 %v627, %v667
    %v669 = vpop.f32.mrf.mxu0
    %670 = vdwg.mxu0
    %671 = vmatprep.subr.bf16.mxu0 0
    %672 = vmatpush1.bf16.msra.mxu0 0
    %673 = vmatprep.subr.bf16.mxu0 0
    %674 = vmatpush1.bf16.msra.mxu0 0
    %675 = vmatprep.subr.bf16.mxu0 0
    %676 = vmatpush1.bf16.msra.mxu0 0
    %677 = vmatprep.subr.bf16.mxu0 0
    %678 = vmatpush1.bf16.msra.mxu0 0
    %679 = vmatprep.subr.bf16.mxu0 0
    %680 = vmatpush1.bf16.msra.mxu0 0
    %681 = vmatprep.subr.bf16.mxu0 0
    %682 = vmatpush1.bf16.msra.mxu0 0
    %683 = vmatprep.subr.bf16.mxu0 0
    %684 = vmatpush1.bf16.msra.mxu0 0
    %685 = vmatprep.subr.bf16.mxu0 0
    %686 = vmatpush1.bf16.msra.mxu0 %v494
    %687 = vmatprep.subr.bf16.mxu0 0
    %688 = vmatpush2.bf16.msra.mxu0 0
    %689 = vmatprep.subr.bf16.mxu0 0
    %690 = vmatpush2.bf16.msra.mxu0 0
    %691 = vmatprep.subr.bf16.mxu0 0
    %692 = vmatpush2.bf16.msra.mxu0 0
    %693 = vmatprep.subr.bf16.mxu0 0
    %694 = vmatpush2.bf16.msra.mxu0 0
    %695 = vmatprep.subr.bf16.mxu0 0
    %696 = vmatpush2.bf16.msra.mxu0 0
    %697 = vmatprep.subr.bf16.mxu0 0
    %698 = vmatpush2.bf16.msra.mxu0 0
    %699 = vmatprep.subr.bf16.mxu0 0
    %700 = vmatpush2.bf16.msra.mxu0 0
    %701 = vmatprep.subr.bf16.mxu0 0
    %702 = vmatpush2.bf16.msra.mxu0 0
    %703 = vmatprep.mubr.bf16.mxu0 0
    %704 = vmatmul.mubr.bf16.gmra.mxu0 %v546
    %v705 = vpop.f32.mrf.mxu0
    %v706 = vadd.f32 %v665, %v705
    %v707 = vpop.f32.mrf.mxu0
    %v708 = vpop.f32.mrf.mxu0
    %v709 = vadd.f32 %v668, %v708
    %v710 = vpop.f32.mrf.mxu0
    %711 = vdwg.mxu0
    %v712 = vmax.f32 %v706, 0.0
    %v713 = vmax.f32 %v709, 0.0
    %v714 = vpack.c.bf16 %v713, %v712
    %v715 = vld [vmem:[#allocation7] sm:$0xf]
    %v716 = vld [vmem:[#allocation7 + $0x4] sm:$0xf]
    %v717 = vld [vmem:[#allocation7 + $0x8] sm:$0xf]
    %v718 = vld [vmem:[#allocation7 + $0xc] sm:$0xf]
    %v719 = vld [vmem:[#allocation7 + $0x10] sm:$0xf]
    %v720 = vld [vmem:[#allocation7 + $0x14] sm:$0xf]
    %v721 = vld [vmem:[#allocation7 + $0x18] sm:$0xf]
    %v722 = vld [vmem:[#allocation7 + $0x1c] sm:$0xf]
    %v723 = vld [vmem:[#allocation7 + $0x20] sm:$0xf]
    %v724 = vld [vmem:[#allocation7 + $0x24] sm:$0xf]
    %v725 = vld [vmem:[#allocation7 + $0x28] sm:$0xf]
    %v726 = vld [vmem:[#allocation7 + $0x2c] sm:$0xf]
    %v727 = vld [vmem:[#allocation7 + $0x30] sm:$0xf]
    %v728 = vld [vmem:[#allocation7 + $0x34] sm:$0xf]
    %v729 = vld [vmem:[#allocation7 + $0x38] sm:$0xf]
    %v730 = vld [vmem:[#allocation7 + $0x3c] sm:$0xf]
    %v731 = vld [vmem:[%s4] sm:$0x1]
    %v733 = vlaneseq
    %v734 = vshrl.u32 %v733, 7
    %v735 = vsub.s32 0, %v734
    %v736 = vrot.slane %v731, %v735
    %v754 = vunpack.c.l.b16 %v715
    %v755 = vunpack.c.l.b16 %v716
    %v756 = vunpack.c.l.b16 %v717
    %v757 = vunpack.c.l.b16 %v718
    %v758 = vunpack.c.l.b16 %v719
    %v759 = vunpack.c.l.b16 %v720
    %v760 = vunpack.c.l.b16 %v721
    %v761 = vunpack.c.l.b16 %v722
    %v762 = vunpack.c.l.b16 %v723
    %v763 = vunpack.c.l.b16 %v724
    %v764 = vunpack.c.l.b16 %v725
    %v765 = vunpack.c.l.b16 %v726
    %v766 = vunpack.c.l.b16 %v727
    %v767 = vunpack.c.l.b16 %v728
    %v768 = vunpack.c.l.b16 %v729
    %v769 = vunpack.c.l.b16 %v730
    %v770 = vpack.c.b16 %v755, %v754
    %v771 = vpack.c.b16 %v757, %v756
    %v772 = vpack.c.b16 %v759, %v758
    %v773 = vpack.c.b16 %v761, %v760
    %v774 = vpack.c.b16 %v763, %v762
    %v775 = vpack.c.b16 %v765, %v764
    %v776 = vpack.c.b16 %v767, %v766
    %v777 = vpack.c.b16 %v769, %v768
    %786 = vmatprep.subr.bf16.mxu0 0
    %787 = vmatpush1.bf16.msra.mxu0 %v777
    %788 = vmatprep.subr.bf16.mxu0 0
    %789 = vmatpush1.bf16.msra.mxu0 %v776
    %790 = vmatprep.subr.bf16.mxu0 0
    %791 = vmatpush1.bf16.msra.mxu0 %v775
    %792 = vmatprep.subr.bf16.mxu0 0
    %793 = vmatpush1.bf16.msra.mxu0 %v774
    %794 = vmatprep.subr.bf16.mxu0 0
    %795 = vmatpush1.bf16.msra.mxu0 %v773
    %796 = vmatprep.subr.bf16.mxu0 0
    %797 = vmatpush1.bf16.msra.mxu0 %v772
    %798 = vmatprep.subr.bf16.mxu0 0
    %799 = vmatpush1.bf16.msra.mxu0 %v771
    %800 = vmatprep.subr.bf16.mxu0 0
    %801 = vmatpush1.bf16.msra.mxu0 %v770
    %802 = vmatprep.subr.bf16.mxu0 0
    %803 = vmatpush2.bf16.msra.mxu0 0
    %804 = vmatprep.subr.bf16.mxu0 0
    %805 = vmatpush2.bf16.msra.mxu0 0
    %806 = vmatprep.subr.bf16.mxu0 0
    %807 = vmatpush2.bf16.msra.mxu0 0
    %808 = vmatprep.subr.bf16.mxu0 0
    %809 = vmatpush2.bf16.msra.mxu0 0
    %810 = vmatprep.subr.bf16.mxu0 0
    %811 = vmatpush2.bf16.msra.mxu0 0
    %812 = vmatprep.subr.bf16.mxu0 0
    %813 = vmatpush2.bf16.msra.mxu0 0
    %814 = vmatprep.subr.bf16.mxu0 0
    %815 = vmatpush2.bf16.msra.mxu0 0
    %816 = vmatprep.subr.bf16.mxu0 0
    %817 = vmatpush2.bf16.msra.mxu0 0
    %818 = vmatprep.mubr.bf16.mxu0 0
    %819 = vmatmul.mubr.bf16.gmra.mxu0 %v714
    %v820 = vpop.f32.mrf.mxu0
    %v821 = vadd.f32 %v736, %v820
    %v822 = vpop.f32.mrf.mxu0
    %v823 = vpop.f32.mrf.mxu0
    %v824 = vadd.f32 %v736, %v823
    %v825 = vpop.f32.mrf.mxu0
    %826 = vdwg.mxu0
    %v827 = vmax.f32 %v821, 0.0
    %v828 = vmax.f32 %v824, 0.0
    %v829 = vpack.c.bf16 %v828, %v827
    %v830 = vld [vmem:[#allocation8] sm:$0xf]
    %v831 = vld [vmem:[#allocation8 + $0x4] sm:$0xf]
    %v832 = vld [vmem:[#allocation8 + $0x8] sm:$0xf]
    %v833 = vld [vmem:[#allocation8 + $0xc] sm:$0xf]
    %v834 = vld [vmem:[#allocation8 + $0x10] sm:$0xf]
    %v835 = vld [vmem:[#allocation8 + $0x14] sm:$0xf]
    %v836 = vld [vmem:[#allocation8 + $0x18] sm:$0xf]
    %v837 = vld [vmem:[#allocation8 + $0x1c] sm:$0xf]
    %v838 = vld [vmem:[#allocation8 + $0x20] sm:$0xf]
    %v839 = vld [vmem:[#allocation8 + $0x24] sm:$0xf]
    %v840 = vld [vmem:[#allocation8 + $0x28] sm:$0xf]
    %v841 = vld [vmem:[#allocation8 + $0x2c] sm:$0xf]
    %v842 = vld [vmem:[#allocation8 + $0x30] sm:$0xf]
    %v843 = vld [vmem:[#allocation8 + $0x34] sm:$0xf]
    %v844 = vld [vmem:[#allocation8 + $0x38] sm:$0xf]
    %v845 = vld [vmem:[#allocation8 + $0x3c] sm:$0xf]
    %v846 = vld [vmem:[%s6] sm:$0x1]
    %v848 = vlaneseq
    %v849 = vshrl.u32 %v848, 7
    %v850 = vsub.s32 0, %v849
    %v851 = vrot.slane %v846, %v850
    %v869 = vunpack.c.l.b16 %v830
    %v870 = vunpack.c.l.b16 %v831
    %v871 = vunpack.c.l.b16 %v832
    %v872 = vunpack.c.l.b16 %v833
    %v873 = vunpack.c.l.b16 %v834
    %v874 = vunpack.c.l.b16 %v835
    %v875 = vunpack.c.l.b16 %v836
    %v876 = vunpack.c.l.b16 %v837
    %v877 = vunpack.c.l.b16 %v838
    %v878 = vunpack.c.l.b16 %v839
    %v879 = vunpack.c.l.b16 %v840
    %v880 = vunpack.c.l.b16 %v841
    %v881 = vunpack.c.l.b16 %v842
    %v882 = vunpack.c.l.b16 %v843
    %v883 = vunpack.c.l.b16 %v844
    %v884 = vunpack.c.l.b16 %v845
    %v885 = vpack.c.b16 %v870, %v869
    %v886 = vpack.c.b16 %v872, %v871
    %v887 = vpack.c.b16 %v874, %v873
    %v888 = vpack.c.b16 %v876, %v875
    %v889 = vpack.c.b16 %v878, %v877
    %v890 = vpack.c.b16 %v880, %v879
    %v891 = vpack.c.b16 %v882, %v881
    %v892 = vpack.c.b16 %v884, %v883
    %901 = vmatprep.subr.bf16.mxu0 0
    %902 = vmatpush1.bf16.msra.mxu0 %v892
    %903 = vmatprep.subr.bf16.mxu0 0
    %904 = vmatpush1.bf16.msra.mxu0 %v891
    %905 = vmatprep.subr.bf16.mxu0 0
    %906 = vmatpush1.bf16.msra.mxu0 %v890
    %907 = vmatprep.subr.bf16.mxu0 0
    %908 = vmatpush1.bf16.msra.mxu0 %v889
    %909 = vmatprep.subr.bf16.mxu0 0
    %910 = vmatpush1.bf16.msra.mxu0 %v888
    %911 = vmatprep.subr.bf16.mxu0 0
    %912 = vmatpush1.bf16.msra.mxu0 %v887
    %913 = vmatprep.subr.bf16.mxu0 0
    %914 = vmatpush1.bf16.msra.mxu0 %v886
    %915 = vmatprep.subr.bf16.mxu0 0
    %916 = vmatpush1.bf16.msra.mxu0 %v885
    %917 = vmatprep.subr.bf16.mxu0 0
    %918 = vmatpush2.bf16.msra.mxu0 0
    %919 = vmatprep.subr.bf16.mxu0 0
    %920 = vmatpush2.bf16.msra.mxu0 0
    %921 = vmatprep.subr.bf16.mxu0 0
    %922 = vmatpush2.bf16.msra.mxu0 0
    %923 = vmatprep.subr.bf16.mxu0 0
    %924 = vmatpush2.bf16.msra.mxu0 0
    %925 = vmatprep.subr.bf16.mxu0 0
    %926 = vmatpush2.bf16.msra.mxu0 0
    %927 = vmatprep.subr.bf16.mxu0 0
    %928 = vmatpush2.bf16.msra.mxu0 0
    %929 = vmatprep.subr.bf16.mxu0 0
    %930 = vmatpush2.bf16.msra.mxu0 0
    %931 = vmatprep.subr.bf16.mxu0 0
    %932 = vmatpush2.bf16.msra.mxu0 0
    %933 = vmatprep.mubr.bf16.mxu0 0
    %934 = vmatmul.mubr.bf16.gmra.mxu0 %v829
    %v935 = vpop.f32.mrf.mxu0
    %v936 = vadd.f32 %v851, %v935
    %v937 = vpop.f32.mrf.mxu0
    %v938 = vpop.f32.mrf.mxu0
    %v939 = vadd.f32 %v851, %v938
    %v940 = vpop.f32.mrf.mxu0
    %941 = vdwg.mxu0
    %v942 = vmax.f32 %v936, 0.0
    %v943 = vmax.f32 %v939, 0.0
    %v944 = vpack.c.bf16 %v943, %v942
    %v945 = vld [vmem:[#allocation10] sm:$0xf]
    %v946 = vld [vmem:[#allocation10 + $0x4] sm:$0xf]
    %v947 = vld [vmem:[#allocation10 + $0x8] sm:$0xf]
    %v948 = vld [vmem:[#allocation10 + $0xc] sm:$0xf]
    %v949 = vld [vmem:[#allocation10 + $0x10] sm:$0xf]
    %v950 = vld [vmem:[#allocation10 + $0x14] sm:$0xf]
    %v951 = vld [vmem:[#allocation10 + $0x18] sm:$0xf]
    %v952 = vld [vmem:[#allocation10 + $0x1c] sm:$0xf]
    %v953 = vld [vmem:[#allocation10 + $0x20] sm:$0xf]
    %v954 = vld [vmem:[#allocation10 + $0x24] sm:$0xf]
    %v955 = vld [vmem:[#allocation10 + $0x28] sm:$0xf]
    %v956 = vld [vmem:[#allocation10 + $0x2c] sm:$0xf]
    %v957 = vld [vmem:[#allocation10 + $0x30] sm:$0xf]
    %v958 = vld [vmem:[#allocation10 + $0x34] sm:$0xf]
    %v959 = vld [vmem:[#allocation10 + $0x38] sm:$0xf]
    %v960 = vld [vmem:[#allocation10 + $0x3c] sm:$0xf]
    %v961 = vld [vmem:[%s8] sm:$0x1]
    %v963 = vlaneseq
    %v964 = vshrl.u32 %v963, 7
    %v965 = vsub.s32 0, %v964
    %v966 = vrot.slane %v961, %v965
    %v984 = vunpack.c.l.b16 %v945
    %v985 = vunpack.c.l.b16 %v946
    %v986 = vunpack.c.l.b16 %v947
    %v987 = vunpack.c.l.b16 %v948
    %v988 = vunpack.c.l.b16 %v949
    %v989 = vunpack.c.l.b16 %v950
    %v990 = vunpack.c.l.b16 %v951
    %v991 = vunpack.c.l.b16 %v952
    %v992 = vunpack.c.l.b16 %v953
    %v993 = vunpack.c.l.b16 %v954
    %v994 = vunpack.c.l.b16 %v955
    %v995 = vunpack.c.l.b16 %v956
    %v996 = vunpack.c.l.b16 %v957
    %v997 = vunpack.c.l.b16 %v958
    %v998 = vunpack.c.l.b16 %v959
    %v999 = vunpack.c.l.b16 %v960
    %v1000 = vpack.c.b16 %v985, %v984
    %v1001 = vpack.c.b16 %v987, %v986
    %v1002 = vpack.c.b16 %v989, %v988
    %v1003 = vpack.c.b16 %v991, %v990
    %v1004 = vpack.c.b16 %v993, %v992
    %v1005 = vpack.c.b16 %v995, %v994
    %v1006 = vpack.c.b16 %v997, %v996
    %v1007 = vpack.c.b16 %v999, %v998
    %1016 = vmatprep.subr.bf16.mxu0 0
    %1017 = vmatpush1.bf16.msra.mxu0 %v1007
    %1018 = vmatprep.subr.bf16.mxu0 0
    %1019 = vmatpush1.bf16.msra.mxu0 %v1006
    %1020 = vmatprep.subr.bf16.mxu0 0
    %1021 = vmatpush1.bf16.msra.mxu0 %v1005
    %1022 = vmatprep.subr.bf16.mxu0 0
    %1023 = vmatpush1.bf16.msra.mxu0 %v1004
    %1024 = vmatprep.subr.bf16.mxu0 0
    %1025 = vmatpush1.bf16.msra.mxu0 %v1003
    %1026 = vmatprep.subr.bf16.mxu0 0
    %1027 = vmatpush1.bf16.msra.mxu0 %v1002
    %1028 = vmatprep.subr.bf16.mxu0 0
    %1029 = vmatpush1.bf16.msra.mxu0 %v1001
    %1030 = vmatprep.subr.bf16.mxu0 0
    %1031 = vmatpush1.bf16.msra.mxu0 %v1000
    %1032 = vmatprep.subr.bf16.mxu0 0
    %1033 = vmatpush2.bf16.msra.mxu0 0
    %1034 = vmatprep.subr.bf16.mxu0 0
    %1035 = vmatpush2.bf16.msra.mxu0 0
    %1036 = vmatprep.subr.bf16.mxu0 0
    %1037 = vmatpush2.bf16.msra.mxu0 0
    %1038 = vmatprep.subr.bf16.mxu0 0
    %1039 = vmatpush2.bf16.msra.mxu0 0
    %1040 = vmatprep.subr.bf16.mxu0 0
    %1041 = vmatpush2.bf16.msra.mxu0 0
    %1042 = vmatprep.subr.bf16.mxu0 0
    %1043 = vmatpush2.bf16.msra.mxu0 0
    %1044 = vmatprep.subr.bf16.mxu0 0
    %1045 = vmatpush2.bf16.msra.mxu0 0
    %1046 = vmatprep.subr.bf16.mxu0 0
    %1047 = vmatpush2.bf16.msra.mxu0 0
    %1048 = vmatprep.mubr.bf16.mxu0 0
    %1049 = vmatmul.mubr.bf16.gmra.mxu0 %v944
    %v1050 = vpop.f32.mrf.mxu0
    %v1051 = vadd.f32 %v966, %v1050
    %v1052 = vpop.f32.mrf.mxu0
    %v1053 = vpop.f32.mrf.mxu0
    %v1054 = vadd.f32 %v966, %v1053
    %v1055 = vpop.f32.mrf.mxu0
    %1056 = vdwg.mxu0
    %1057 = vmax.xlane.f32.xlu0 %v1051
    %v1058 = vpop.xlane.xlu0 %1057
    %1059 = vmax.xlane.f32.xlu0 %v1054
    %v1060 = vpop.xlane.xlu0 %1059
    %v1061 = vsub.f32 %v1051, %v1058
    %v1062 = vsub.f32 %v1054, %v1060
    %v1063 = vmul.f32 %v1061, 1.442695
    %v1064 = vpow.pop %v1063
    %v1065 = vmul.f32 %v1062, 1.442695
    %v1066 = vpow.pop %v1065
    %1067 = vadd.xlane.f32.xlu0 %v1064
    %v1068 = vpop.xlane.xlu0 %1067
    %1069 = vadd.xlane.f32.xlu0 %v1066
    %v1070 = vpop.xlane.xlu0 %1069
    %v1071 = vlog2.pop %v1068
    %v1072 = vmul.f32 %v1071, 0.6931472
    %v1073 = vlog2.pop %v1070
    %v1074 = vmul.f32 %v1073, 0.6931472
    %v1075 = vsub.f32 %v1061, %v1072
    %v1076 = vsub.f32 %v1062, %v1074
    %1077 = vst [vmem:[#allocation11] sm:$0xff] %v1075
    %1078 = vst [vmem:[#allocation11 + $0x8] sm:$0xff] %v1076
    // Predicated region
    $region58: #{tpu_custom_call.1} parent=1 // pred_check
      _
    $region59: #{tpu_custom_call.1} parent=1 // pred_check_branch
      %1080 = sbr.rel (0) target = $region61
    $region60: #{tpu_custom_call.1} parent=1 // pred_region
      %s1082 = ssub.s32 256, 256
      %1083 = vsyncadd [#allocation4], %s1082
      %s1084 = sshll.u32 [#allocation11], 4
      %s1085 = int_to_ptr.vmem [resolvable:$true] %s1084
      %1090 = dma.vmem_to_hbm [thread:$0]  %s1085, 256, %s9, [#allocation4], 128, 128, 8
    $region61: #{tpu_custom_call.1} parent=1 // pred_fallthru
      _
    // Predicated region
    $region62: #{tpu_custom_call.1} parent=1 // pred_check
      _
    $region63: #{tpu_custom_call.1} parent=1 // pred_check_branch
      %1092 = sbr.rel (0) target = $region65
    $region64: #{tpu_custom_call.1} parent=1 // pred_region
      %1093 = dma.done [#allocation4], 256
    $region65: #{tpu_custom_call.1} parent=1 // pred_fallthru
      _
    %1094 = vsyncpa [#allocation3], 1
    %1095 = vsyncpa [#allocation6], 1
    %1096 = vsyncpa [#allocation9], 1
    %1097 = vsyncpa [#allocation4], 1

</llo_original>
